<compile_context>
chip_gen: v6e
topology: v6e:2x2x1
jax: 0.10.0
libtpu: 0.0.40
codegen_flags: <defaults>
</compile_context>

<pallas_src>
import jax
import jax.numpy as jnp
from jax.experimental import pallas as pl
from jax.experimental.pallas import tpu as pltpu

LANE = 128            # hardware lane width
MAX_ROWS_TILE = 1024  # sublane rows per grid step -> 1024*128 = 131072 elems/step


def logistic_kernel(params_ref, x_ref, o_ref):
    # params_ref: SMEM [4] = (w0, w1, w2, b)
    # x_ref:      VMEM [3, rows_tile, 128]  (3 feature planes; batch on sublanes+lanes)
    # o_ref:      VMEM [rows_tile, 128]     (fully dense store)
    w0 = params_ref[0]
    w1 = params_ref[1]
    w2 = params_ref[2]
    b = params_ref[3]
    z = x_ref[0] * w0 + x_ref[1] * w1 + x_ref[2] * w2 + b
    # Exact sigmoid. exp runs on the EUP; it saturates correctly for large |z|
    # (exp(-z)->inf gives 0.0, exp(-z)->0 gives 1.0). The kernel is HBM-bound,
    # so the exact divide is hidden; pl.reciprocal(..., approx=True) is a
    # drop-in if VALU pressure ever mattered.
    o_ref[...] = 1.0 / (1.0 + jnp.exp(-z))


def logistic_forward(x, weight, bias, *, max_rows_tile=MAX_ROWS_TILE):
    """x: [N, 3] f32; weight: [1, 3] f32 (torch nn.Linear layout); bias: [1] f32."""
    n, f = x.shape
    o = weight.shape[0]  # = 1 for this module
    assert o == 1 and f == weight.shape[1]

    # Tile sizing: small batches use a single minimal block; large batches use
    # ~131072-element blocks (several grid steps -> both v7x TCs get work).
    r_needed = pl.cdiv(n, LANE)                       # 128-lane rows needed
    rows_tile = max(8, min(max_rows_tile, ((r_needed + 7) // 8) * 8))
    r_pad = ((r_needed + rows_tile - 1) // rows_tile) * rows_tile
    n_pad = r_pad * LANE

    # Single fused pad + transpose + reshape: [N, 3] -> [3, R, 128].
    xt = (
        jnp.pad(x.astype(jnp.float32), ((0, n_pad - n), (0, 0)))
        .T.reshape(f, r_pad, LANE)
    )

    # 4 scalars (w0, w1, w2, b) -> SMEM; no per-element weight traffic.
    params = jnp.concatenate(
        [weight.reshape(-1), bias.reshape(-1)]
    ).astype(jnp.float32)                              # shape (4,)

    grid = (r_pad // rows_tile,)
    out = pl.pallas_call(
        logistic_kernel,
        out_shape=jax.ShapeDtypeStruct((r_pad, LANE), jnp.float32),
        grid=grid,
        in_specs=[
            pl.BlockSpec(memory_space=pltpu.MemorySpace.SMEM),         # params (whole, once)
            pl.BlockSpec((f, rows_tile, LANE), lambda i: (0, i, 0)),    # x feature planes
        ],
        out_specs=pl.BlockSpec((rows_tile, LANE), lambda i: (i, 0)),
        compiler_params=pltpu.CompilerParams(
            dimension_semantics=("parallel",),
            vmem_limit_bytes=32 * 1024 * 1024,
        ),
    )(params, xt)

    # [R, 128] is row-major over batch -> flatten, drop padding, restore [N, 1].
    return out.reshape(n_pad, 1)[:n]


if __name__ == "__main__":
    key = jax.random.PRNGKey(0)
    kw, kb = jax.random.split(key, 2)

    # Deterministic init mimicking nn.Linear(3, 1): U(-1/sqrt(3), 1/sqrt(3)).
    bound = 1.0 / jnp.sqrt(3.0)
    weight = jax.random.uniform(kw, (1, 3), jnp.float32, -bound, bound)
    bias = jax.random.uniform(kb, (1,), jnp.float32, -bound, bound)

    # The module's canonical input ([[2.5, 5.0, 7.5]]) plus one extra row.
    x = jnp.array([[2.5, 5.0, 7.5],
                   [1.0, -2.0, 0.5]], dtype=jnp.float32)

    y = logistic_forward(x, weight, bias)
    jax.block_until_ready(y)

    # Pure-JAX reference check.
    ref = jax.nn.sigmoid(x @ weight.T + bias)
    assert y.shape == ref.shape, (y.shape, ref.shape)
    assert jnp.allclose(y, ref, atol=1e-6), (y, ref)
    print("KERNEL_OK")
</pallas_src>

<mosaic_0001>
module attributes {stable_mosaic.version = 11 : i64} {
  func.func @logistic_kernel(%arg0: i32, %arg1: memref<4xf32, #tpu.memory_space<smem>>, %arg2: memref<3x8x128xf32, #tpu.memory_space<vmem>>, %arg3: memref<8x128xf32, #tpu.memory_space<vmem>>) attributes {dimension_semantics = [#tpu.dimension_semantics<parallel>], iteration_bounds = array<i64: 1>, scalar_prefetch = 0 : i64, scratch_operands = 0 : i64, tpu.core_type = #tpu.core_type<tc>, window_params = [{transform_indices = @transform_0, window_bounds = array<i64: 4>}, {transform_indices = @transform_1, window_bounds = array<i64: 3, 8, 128>}, {transform_indices = @transform_2, window_bounds = array<i64: 8, 128>}]} {
    %c0 = arith.constant 0 : index
    %0 = memref.load %arg1[%c0] : memref<4xf32, #tpu.memory_space<smem>>
    %c1 = arith.constant 1 : index
    %1 = memref.load %arg1[%c1] : memref<4xf32, #tpu.memory_space<smem>>
    %c2 = arith.constant 2 : index
    %2 = memref.load %arg1[%c2] : memref<4xf32, #tpu.memory_space<smem>>
    %c3 = arith.constant 3 : index
    %3 = memref.load %arg1[%c3] : memref<4xf32, #tpu.memory_space<smem>>
    %c0_0 = arith.constant 0 : index
    %c0_1 = arith.constant 0 : index
    %c0_2 = arith.constant 0 : index
    %4 = vector.load %arg2[%c0_0, %c0_1, %c0_2] : memref<3x8x128xf32, #tpu.memory_space<vmem>>, vector<1x8x128xf32>
    %5 = vector.shape_cast %4 : vector<1x8x128xf32> to vector<8x128xf32>
    %6 = vector.broadcast %0 : f32 to vector<8x128xf32>
    %7 = arith.mulf %5, %6 : vector<8x128xf32>
    %c1_3 = arith.constant 1 : index
    %c0_4 = arith.constant 0 : index
    %c0_5 = arith.constant 0 : index
    %8 = vector.load %arg2[%c1_3, %c0_4, %c0_5] : memref<3x8x128xf32, #tpu.memory_space<vmem>>, vector<1x8x128xf32>
    %9 = vector.shape_cast %8 : vector<1x8x128xf32> to vector<8x128xf32>
    %10 = vector.broadcast %1 : f32 to vector<8x128xf32>
    %11 = arith.mulf %9, %10 : vector<8x128xf32>
    %12 = arith.addf %7, %11 : vector<8x128xf32>
    %c2_6 = arith.constant 2 : index
    %c0_7 = arith.constant 0 : index
    %c0_8 = arith.constant 0 : index
    %13 = vector.load %arg2[%c2_6, %c0_7, %c0_8] : memref<3x8x128xf32, #tpu.memory_space<vmem>>, vector<1x8x128xf32>
    %14 = vector.shape_cast %13 : vector<1x8x128xf32> to vector<8x128xf32>
    %15 = vector.broadcast %2 : f32 to vector<8x128xf32>
    %16 = arith.mulf %14, %15 : vector<8x128xf32>
    %17 = arith.addf %12, %16 : vector<8x128xf32>
    %18 = vector.broadcast %3 : f32 to vector<8x128xf32>
    %19 = arith.addf %17, %18 : vector<8x128xf32>
    %cst = arith.constant 0.000000e+00 : f32
    %20 = vector.broadcast %cst : f32 to vector<8x128xf32>
    %21 = arith.subf %20, %19 : vector<8x128xf32>
    %22 = math.exp %21 : vector<8x128xf32>
    %cst_9 = arith.constant 1.000000e+00 : f32
    %23 = vector.broadcast %cst_9 : f32 to vector<8x128xf32>
    %24 = arith.addf %23, %22 : vector<8x128xf32>
    %cst_10 = arith.constant 1.000000e+00 : f32
    %25 = vector.broadcast %cst_10 : f32 to vector<8x128xf32>
    %26 = arith.divf %25, %24 : vector<8x128xf32>
    %c0_11 = arith.constant 0 : index
    %c0_12 = arith.constant 0 : index
    %27 = vector.load %arg3[%c0_11, %c0_12] : memref<8x128xf32, #tpu.memory_space<vmem>>, vector<8x128xf32>
    tpu.vector_store %arg3[%c0_11, %c0_12], %26 {strides = array<i32>} : memref<8x128xf32, #tpu.memory_space<vmem>>, vector<8x128xf32>,
    return
  }
  func.func @transform_0(%arg0: i32) -> i32 {
    %c0_i32 = arith.constant 0 : i32
    %c0_i32_0 = arith.constant 0 : i32
    return %c0_i32 : i32
  }
  func.func @transform_1(%arg0: i32) -> (i32, i32, i32) {
    %c0_i32 = arith.constant 0 : i32
    %c0_i32_0 = arith.constant 0 : i32
    %c0_i32_1 = arith.constant 0 : i32
    return %c0_i32, %arg0, %c0_i32_0 : i32, i32, i32
  }
  func.func @transform_2(%arg0: i32) -> (i32, i32) {
    %c0_i32 = arith.constant 0 : i32
    %c0_i32_0 = arith.constant 0 : i32
    return %arg0, %c0_i32 : i32, i32
  }
}

</mosaic_0001>

<llo_original>
// kernel: tpu_custom_call.1
$region0: #{tpu_custom_call.1}
  #allocation0 [shape = 'u32[]', space=smem, size = 0x4, offset = 0x4, fixed_abs, tag = 'smem constant byte address 0x4 - core index']
  #allocation1 [shape = 'u32[144,128]{1,0:T(1,128)}', space=vmem, size = 0x12000, scoped, tag = 'internal scratch']
  %s0 = inlined_call_operand.hbm [shape: f32[4], index: 0, kind: input, shape index: {}]
  %s1 = inlined_call_operand.hbm [shape: f32[3,8,128], index: 1, kind: input, shape index: {}]
  %s2 = inlined_call_operand.hbm [shape: f32[8,128], index: 2, kind: output, shape index: {}]
  %s3 = sld [smem:[#allocation0]]
  $region26: #{tpu_custom_call.1} parent=0
    _
  %s5 = ssub.s32 1, %s3
  %s6 = scalar_select 0, %s5, %s3
  $region1: #{tpu_custom_call.1} parent=0
    #allocation2 [shape = 'u8[512]{0}', space=smem, size = 0x200, scoped, tag = 'input window, operand 0, single buffered']
    #allocation3 [shape = 's32[1]{0}', space=sflag, size = 0x4, scoped, tag = 'scoped memory for tpu_custom_call.1']
    #allocation4 [shape = 's32[1]{0}', space=sflag, size = 0x4, scoped, tag = 'scoped memory for tpu_custom_call.1']
    #allocation5 [shape = 's32[1]{0}', space=sflag, size = 0x4, scoped, tag = 'scoped memory for tpu_custom_call.1']
    #allocation6 [shape = 'u8[12288]{0}', space=vmem, size = 0x3000, scoped, tag = 'input window, operand 1, single buffered']
    #allocation7 [shape = 'u8[4096]{0}', space=vmem, size = 0x1000, scoped, tag = 'output window, operand 0, single buffered']
    %7 = vsyncpa [#allocation5], 0
    %8 = vsyncpa [#allocation3], 0
    %9 = vsyncpa [#allocation4], 0
    // Predicated region
    $region2: #{tpu_custom_call.1} parent=1 // pred_check
      _
    $region3: #{tpu_custom_call.1} parent=1 // pred_check_branch
      %11 = sbr.rel (0) target = $region5
    $region4: #{tpu_custom_call.1} parent=1 // pred_region
      %s13 = ssub.s32 16, 16
      %14 = vsyncadd [#allocation5], %s13
      %17 = dma.hbm_to_smem %s0, 16, [#allocation2], [#allocation5]
    $region5: #{tpu_custom_call.1} parent=1 // pred_fallthru
      _
    // Predicated region
    $region6: #{tpu_custom_call.1} parent=1 // pred_check
      _
    $region7: #{tpu_custom_call.1} parent=1 // pred_check_branch
      %19 = sbr.rel (0) target = $region9
    $region8: #{tpu_custom_call.1} parent=1 // pred_region
      %s21 = ssub.s32 384, 384
      %22 = vsyncadd [#allocation3], %s21
      %s23 = sshll.u32 [#allocation6], 4
      %s24 = int_to_ptr.vmem [resolvable:$true] %s23
      %29 = dma.hbm_to_vmem [thread:$0]  %s1, 384, %s24, [#allocation3], 128, 128, 8
    $region9: #{tpu_custom_call.1} parent=1 // pred_fallthru
      _
    // Predicated region
    $region10: #{tpu_custom_call.1} parent=1 // pred_check
      _
    $region11: #{tpu_custom_call.1} parent=1 // pred_check_branch
      %31 = sbr.rel (0) target = $region13
    $region12: #{tpu_custom_call.1} parent=1 // pred_region
      %32 = dma.done [#allocation5], 16
    $region13: #{tpu_custom_call.1} parent=1 // pred_fallthru
      _
    // Predicated region
    $region14: #{tpu_custom_call.1} parent=1 // pred_check
      _
    $region15: #{tpu_custom_call.1} parent=1 // pred_check_branch
      %34 = sbr.rel (0) target = $region17
    $region16: #{tpu_custom_call.1} parent=1 // pred_region
      %35 = dma.done [#allocation3], 384
    $region17: #{tpu_custom_call.1} parent=1 // pred_fallthru
      _
    %36 = sfence
    %s37 = sld [smem:[#allocation2]]
    %s38 = sld [smem:[#allocation2 + $0x1]]
    %s39 = sld [smem:[#allocation2 + $0x2]]
    %s40 = sld [smem:[#allocation2 + $0x3]]
    %v41 = vld [vmem:[#allocation6] sm:$0xff]
    %v42 = vstv %s37
    %v43 = vmul.f32 %v41, %v42
    %s44 = scalar_lea.vmem [#allocation6], 8
    %v45 = vld [vmem:[%s44] sm:$0xff]
    %v46 = vstv %s38
    %v47 = vmul.f32 %v45, %v46
    %v48 = vadd.f32 %v43, %v47
    %s49 = scalar_lea.vmem [#allocation6], 16
    %v50 = vld [vmem:[%s49] sm:$0xff]
    %v51 = vstv %s39
    %v52 = vmul.f32 %v50, %v51
    %v53 = vadd.f32 %v48, %v52
    %v54 = vstv %s40
    %v55 = vadd.f32 %v53, %v54
    %v56 = vsub.f32 0.0, %v55
    %v57 = vmul.f32 %v56, 1.442695
    %v58 = vpow.pop %v57
    %v59 = vadd.f32 %v58, 1.0
    %v60 = vrcp.pop %v59
    %v61 = vmul.f32 1.0, %v60
    %62 = vst [vmem:[#allocation7] sm:$0xff] %v61
    // Predicated region
    $region18: #{tpu_custom_call.1} parent=1 // pred_check
      _
    $region19: #{tpu_custom_call.1} parent=1 // pred_check_branch
      %64 = sbr.rel (0) target = $region21
    $region20: #{tpu_custom_call.1} parent=1 // pred_region
      %s66 = ssub.s32 128, 128
      %67 = vsyncadd [#allocation4], %s66
      %s69 = sshll.u32 [#allocation7], 4
      %s70 = int_to_ptr.vmem [resolvable:$true] %s69
      %72 = dma.vmem_to_hbm [thread:$0]  %s70, 128, %s2, [#allocation4]
    $region21: #{tpu_custom_call.1} parent=1 // pred_fallthru
      _
    // Predicated region
    $region22: #{tpu_custom_call.1} parent=1 // pred_check
      _
    $region23: #{tpu_custom_call.1} parent=1 // pred_check_branch
      %74 = sbr.rel (0) target = $region25
    $region24: #{tpu_custom_call.1} parent=1 // pred_region
      %75 = dma.done [#allocation4], 128
    $region25: #{tpu_custom_call.1} parent=1 // pred_fallthru
      _
    %76 = vsyncpa [#allocation3], 1
    %77 = vsyncpa [#allocation4], 1
    %78 = vsyncpa [#allocation5], 1

</llo_original>
